<compile_context>
chip_gen: v6e
topology: v6e:2x2x1
jax: 0.10.0
libtpu: 0.0.40
codegen_flags: <defaults>
</compile_context>

<pallas_src>
import jax
import jax.numpy as jnp
from jax import lax
from jax.experimental import pallas as pl
from jax.experimental.pallas import tpu as pltpu


def _round_up(n: int, m: int) -> int:
    return ((n + m - 1) // m) * m


def _linear_sigmoid_kernel(x_ref, w_ref, b_ref, o_ref):
    # x_ref: [tb, F]  native layout (F = 30 lane-pads to 128 in VMEM)
    # w_ref: [F, 1]   resident across all batch tiles
    # b_ref: [1]      SMEM scalar bias
    # o_ref: [tb, 1]
    z = jnp.dot(x_ref[...], w_ref[...], preferred_element_type=jnp.float32)  # MXU
    z = z + b_ref[0]
    o_ref[...] = jax.nn.sigmoid(z).astype(o_ref.dtype)


def breast_cancer_detection_forward(x, w, b, *, tile_batch=8192):
    """x: [B, 30] f32, w: [30, 1] f32, b: [1] f32 -> [B, 1] f32 = sigmoid(x @ w + b)."""
    B, F = x.shape
    x = x.astype(jnp.float32)
    w = w.reshape(F, 1).astype(jnp.float32)
    b = b.reshape(1).astype(jnp.float32)

    # Batch tile selection (no host-side padding of X):
    #   * B <= tile_batch: one block covering the whole array (full-extent dims
    #     satisfy the (8,128) rule regardless of divisibility).
    #   * B  > tile_batch: multiple-of-8 tile; Pallas pads the ragged last block
    #     on read and masks it on write.
    if B <= tile_batch:
        tb = B
    else:
        tb = _round_up(tile_batch, 8)
    n_tiles = pl.cdiv(B, tb)

    # VMEM budget: (tb, 30) and (tb, 1) both lane-pad to 128 lanes -> tb*512 B
    # per buffer; 2 arrays x 2 pipeline buffers, with 2x headroom + 4 MiB slack.
    buf_bytes = _round_up(tb, 8) * 512
    vmem_limit = min(max(8 * buf_bytes + (4 << 20), 16 << 20), 48 << 20)

    out = pl.pallas_call(
        _linear_sigmoid_kernel,
        out_shape=jax.ShapeDtypeStruct((B, 1), jnp.float32),
        grid_spec=pltpu.PrefetchScalarGridSpec(
            num_scalar_prefetch=0,
            grid=(n_tiles,),
            in_specs=[
                pl.BlockSpec((tb, F), lambda i: (i, 0)),             # streamed batch tile
                pl.BlockSpec((F, 1), lambda i: (0, 0)),              # weights stay resident
                pl.BlockSpec(memory_space=pltpu.MemorySpace.SMEM),   # bias scalar in SMEM
            ],
            out_specs=pl.BlockSpec((tb, 1), lambda i: (i, 0)),
        ),
        compiler_params=pltpu.CompilerParams(
            # Independent batch tiles.  On v7x, pltpu.CORE_PARALLEL would force a
            # genuine 2-TensorCore split; "parallel" kept for cross-gen portability.
            dimension_semantics=("parallel",),
            vmem_limit_bytes=vmem_limit,
        ),
    )(x, w, b)

    return out


if __name__ == "__main__":
    key = jax.random.PRNGKey(0)
    kx, kw, kb, kx2 = jax.random.split(key, 4)

    F = 30
    # Deterministic parameter init (mimics nn.Linear's uniform(-1/sqrt(30), 1/sqrt(30)))
    bound = 1.0 / jnp.sqrt(jnp.float32(F))
    w = jax.random.uniform(kw, (F, 1), dtype=jnp.float32, minval=-bound, maxval=bound)
    b = jax.random.uniform(kb, (1,), dtype=jnp.float32, minval=-bound, maxval=bound)

    def ref_forward(xv):
        z = jnp.dot(xv, w, precision=lax.Precision.HIGHEST) + b[None, :]
        return jax.nn.sigmoid(z)

    # Small shape consistent with the module: batch=8, 30 input features.
    B = 8
    x = jax.random.normal(kx, (B, F), dtype=jnp.float32)
    out = breast_cancer_detection_forward(x, w, b)
    jax.block_until_ready(out)
    assert out.shape == (B, 1)
    assert jnp.allclose(out, ref_forward(x), atol=1e-4, rtol=1e-4)

    # Multi-tile (pipelined) path with a ragged final tile (300 = 2*128 + 44).
    B2 = 300
    x2 = jax.random.normal(kx2, (B2, F), dtype=jnp.float32)
    out2 = breast_cancer_detection_forward(x2, w, b, tile_batch=128)
    jax.block_until_ready(out2)
    assert out2.shape == (B2, 1)
    assert jnp.allclose(out2, ref_forward(x2), atol=1e-4, rtol=1e-4)

    print("KERNEL_OK")
</pallas_src>

<mosaic_0001>
module attributes {stable_mosaic.version = 11 : i64} {
  func.func @_linear_sigmoid_kernel(%arg0: i32, %arg1: memref<8x30xf32, #tpu.memory_space<vmem>>, %arg2: memref<30x1xf32, #tpu.memory_space<vmem>>, %arg3: memref<1xf32, #tpu.memory_space<smem>>, %arg4: memref<8x1xf32, #tpu.memory_space<vmem>>) attributes {dimension_semantics = [#tpu.dimension_semantics<parallel>], iteration_bounds = array<i64: 1>, scalar_prefetch = 0 : i64, scratch_operands = 0 : i64, tpu.core_type = #tpu.core_type<tc>, window_params = [{transform_indices = @transform_0, window_bounds = array<i64: 8, 30>}, {pipeline_mode = #tpu.pipeline_mode<synchronous>, transform_indices = @transform_1, window_bounds = array<i64: 30, 1>}, {transform_indices = @transform_2, window_bounds = array<i64: 1>}, {transform_indices = @transform_3, window_bounds = array<i64: 8, 1>}]} {
    %c0 = arith.constant 0 : index
    %c0_0 = arith.constant 0 : index
    %0 = vector.load %arg1[%c0, %c0_0] : memref<8x30xf32, #tpu.memory_space<vmem>>, vector<8x30xf32>
    %c0_1 = arith.constant 0 : index
    %c0_2 = arith.constant 0 : index
    %1 = vector.load %arg2[%c0_1, %c0_2] : memref<30x1xf32, #tpu.memory_space<vmem>>, vector<30x1xf32>
    %cst = arith.constant dense<0.000000e+00> : vector<8x1xf32>
    %2 = tpu.matmul %0, %1, %cst {dimension_numbers = #tpu.dot_dimension_numbers<[1], [0], [0], [1], [0, 0, 1, 1], [], []>} : vector<8x30xf32>, vector<30x1xf32>, vector<8x1xf32> -> vector<8x1xf32>
    %c0_3 = arith.constant 0 : index
    %3 = memref.load %arg3[%c0_3] : memref<1xf32, #tpu.memory_space<smem>>
    %4 = vector.broadcast %3 : f32 to vector<8x1xf32>
    %5 = arith.addf %2, %4 : vector<8x1xf32>
    %6 = arith.negf %5 : vector<8x1xf32>
    %7 = math.exp %6 : vector<8x1xf32>
    %cst_4 = arith.constant 1.000000e+00 : f32
    %8 = vector.broadcast %cst_4 : f32 to vector<8x1xf32>
    %9 = arith.addf %8, %7 : vector<8x1xf32>
    %10 = arith.divf %8, %9 : vector<8x1xf32>
    %c0_5 = arith.constant 0 : index
    %c0_6 = arith.constant 0 : index
    %11 = vector.load %arg4[%c0_5, %c0_6] : memref<8x1xf32, #tpu.memory_space<vmem>>, vector<8x1xf32>
    tpu.vector_store %arg4[%c0_5, %c0_6], %10 {strides = array<i32>} : memref<8x1xf32, #tpu.memory_space<vmem>>, vector<8x1xf32>,
    return
  }
  func.func @transform_0(%arg0: i32) -> (i32, i32) {
    %c0_i32 = arith.constant 0 : i32
    %c0_i32_0 = arith.constant 0 : i32
    return %arg0, %c0_i32 : i32, i32
  }
  func.func @transform_1(%arg0: i32) -> (i32, i32) {
    %c0_i32 = arith.constant 0 : i32
    %c0_i32_0 = arith.constant 0 : i32
    %c0_i32_1 = arith.constant 0 : i32
    return %c0_i32, %c0_i32_0 : i32, i32
  }
  func.func @transform_2(%arg0: i32) -> i32 {
    %c0_i32 = arith.constant 0 : i32
    %c0_i32_0 = arith.constant 0 : i32
    return %c0_i32 : i32
  }
  func.func @transform_3(%arg0: i32) -> (i32, i32) {
    %c0_i32 = arith.constant 0 : i32
    %c0_i32_0 = arith.constant 0 : i32
    return %arg0, %c0_i32 : i32, i32
  }
}

</mosaic_0001>

<llo_original>
// kernel: tpu_custom_call.1
$region0: #{tpu_custom_call.1}
  #allocation0 [shape = 'u32[]', space=smem, size = 0x4, offset = 0x4, fixed_abs, tag = 'smem constant byte address 0x4 - core index']
  #allocation1 [shape = 'u32[144,128]{1,0:T(1,128)}', space=vmem, size = 0x12000, scoped, tag = 'internal scratch']
  #allocation2 [shape = 'f32[1]{0:T(128)S(6)}', space=smem, size = 0x200, scoped, tag = 'scoped memory for tpu_custom_call.1']
  %s0 = inlined_call_operand.vmem [shape: f32[8,30], index: 0, kind: input, shape index: {}]
  %s1 = inlined_call_operand.vmem [shape: f32[30,1], index: 1, kind: input, shape index: {}]
  %s2 = inlined_call_operand.<no memory space> [shape: f32[1], index: 2, kind: input, shape index: {}]
  %s3 = inlined_call_operand.vmem [shape: f32[8,1], index: 3, kind: output, shape index: {}]
  %s4 = sld [smem:[#allocation0]]
  $region22: #{tpu_custom_call.1} parent=0
    _
  %s6 = ssub.s32 1, %s4
  %s7 = scalar_select 0, %s6, %s4
  %8 = sst [smem:[#allocation2]] %s2
  // Predicated region
  $region2: #{tpu_custom_call.1} parent=0 // pred_check
    _
  $region3: #{tpu_custom_call.1} parent=0 // pred_check_branch
    %10 = sbr.rel (0) target = $region5
  $region4: #{tpu_custom_call.1} parent=0 // pred_region
    _
  $region5: #{tpu_custom_call.1} parent=0 // pred_fallthru
    _
  // Predicated region
  $region6: #{tpu_custom_call.1} parent=0 // pred_check
    _
  $region7: #{tpu_custom_call.1} parent=0 // pred_check_branch
    %12 = sbr.rel (0) target = $region9
  $region8: #{tpu_custom_call.1} parent=0 // pred_region
    _
  $region9: #{tpu_custom_call.1} parent=0 // pred_fallthru
    _
  // Predicated region
  $region10: #{tpu_custom_call.1} parent=0 // pred_check
    _
  $region11: #{tpu_custom_call.1} parent=0 // pred_check_branch
    %14 = sbr.rel (0) target = $region13
  $region12: #{tpu_custom_call.1} parent=0 // pred_region
    _
  $region13: #{tpu_custom_call.1} parent=0 // pred_fallthru
    _
  %v15 = vld [vmem:[%s0] sm:$0xff]
  %v16 = vld [vmem:[%s1] sm:$0xff]
  %v17 = vld [vmem:[%s1 + $0x8] sm:$0xff]
  %v18 = vld [vmem:[%s1 + $0x10] sm:$0xff]
  %v19 = vld [vmem:[%s1 + $0x18] sm:$0x3f]
  %s20 = sld [smem:[#allocation2]]
  %v21 = vstv %s20
  %vm22 = vcmask 244736
  %v24 = vsel %vm22, %v15, 0
  %vm26 = vcmask 1045504
  %v28 = vsel %vm26, %v19, 0
  %30 = vmatprep.subr.mxu0 0.0
  %31 = vmatpush1.msra.mxu0 0.0
  %32 = vmatprep.subr.mxu0 0.0
  %33 = vmatpush1.msra.mxu0 0.0
  %34 = vmatprep.subr.mxu0 0.0
  %35 = vmatpush1.msra.mxu0 0.0
  %36 = vmatprep.subr.mxu0 0.0
  %37 = vmatpush1.msra.mxu0 0.0
  %38 = vmatprep.subr.mxu0 0.0
  %39 = vmatpush1.msra.mxu0 0.0
  %40 = vmatprep.subr.mxu0 0.0
  %41 = vmatpush1.msra.mxu0 0.0
  %42 = vmatprep.subr.mxu0 0.0
  %43 = vmatpush1.msra.mxu0 0.0
  %44 = vmatprep.subr.mxu0 0.0
  %45 = vmatpush1.msra.mxu0 0.0
  %46 = vmatprep.subr.mxu0 0.0
  %47 = vmatpush1.msra.mxu0 0.0
  %48 = vmatprep.subr.mxu0 0.0
  %49 = vmatpush1.msra.mxu0 0.0
  %50 = vmatprep.subr.mxu0 0.0
  %51 = vmatpush1.msra.mxu0 0.0
  %52 = vmatprep.subr.mxu0 0.0
  %53 = vmatpush1.msra.mxu0 0.0
  %54 = vmatprep.subr.mxu0 0.0
  %55 = vmatpush1.msra.mxu0 %v28
  %56 = vmatprep.subr.mxu0 0.0
  %57 = vmatpush1.msra.mxu0 %v18
  %58 = vmatprep.subr.mxu0 0.0
  %59 = vmatpush1.msra.mxu0 %v17
  %60 = vmatprep.subr.mxu0 0.0
  %61 = vmatpush1.msra.mxu0 %v16
  %62 = vmatprep.subr.mxu0 0.0
  %63 = vmatpush2.msra.mxu0 0.0
  %64 = vmatprep.subr.mxu0 0.0
  %65 = vmatpush2.msra.mxu0 0.0
  %66 = vmatprep.subr.mxu0 0.0
  %67 = vmatpush2.msra.mxu0 0.0
  %68 = vmatprep.subr.mxu0 0.0
  %69 = vmatpush2.msra.mxu0 0.0
  %70 = vmatprep.subr.mxu0 0.0
  %71 = vmatpush2.msra.mxu0 0.0
  %72 = vmatprep.subr.mxu0 0.0
  %73 = vmatpush2.msra.mxu0 0.0
  %74 = vmatprep.subr.mxu0 0.0
  %75 = vmatpush2.msra.mxu0 0.0
  %76 = vmatprep.subr.mxu0 0.0
  %77 = vmatpush2.msra.mxu0 0.0
  %78 = vmatprep.subr.mxu0 0.0
  %79 = vmatpush2.msra.mxu0 0.0
  %80 = vmatprep.subr.mxu0 0.0
  %81 = vmatpush2.msra.mxu0 0.0
  %82 = vmatprep.subr.mxu0 0.0
  %83 = vmatpush2.msra.mxu0 0.0
  %84 = vmatprep.subr.mxu0 0.0
  %85 = vmatpush2.msra.mxu0 0.0
  %86 = vmatprep.subr.mxu0 0.0
  %87 = vmatpush2.msra.mxu0 0.0
  %88 = vmatprep.subr.mxu0 0.0
  %89 = vmatpush2.msra.mxu0 0.0
  %90 = vmatprep.subr.mxu0 0.0
  %91 = vmatpush2.msra.mxu0 0.0
  %92 = vmatprep.subr.mxu0 0.0
  %93 = vmatpush2.msra.mxu0 0.0
  %94 = vmatprep.mubr.f32.mxu0 0.0
  %95 = vmatmul.mubr.f32.gmra.mxu0 %v24
  %v96 = vpop.f32.mrf.mxu0
  %v97 = vadd.f32 %v21, %v96
  %v98 = vpop.f32.mrf.mxu0
  %99 = vdwg.mxu0
  %v100 = vxor.u32 %v97, 2147483648
  %v101 = vmul.f32 %v100, 1.442695
  %v102 = vpow.pop %v101
  %v103 = vadd.f32 %v102, 1.0
  %v104 = vrcp.pop %v103
  %v105 = vmul.f32 1.0, %v104
  %vm106 = vcmask 7168
  %107 = vst.msk [vmem:[%s3] sm:$0xff] %vm106, %v105
  // Predicated region
  $region14: #{tpu_custom_call.1} parent=0 // pred_check
    _
  $region15: #{tpu_custom_call.1} parent=0 // pred_check_branch
    %109 = sbr.rel (0) target = $region17
  $region16: #{tpu_custom_call.1} parent=0 // pred_region
    _
  $region17: #{tpu_custom_call.1} parent=0 // pred_fallthru
    _
  // Predicated region
  $region18: #{tpu_custom_call.1} parent=0 // pred_check
    _
  $region19: #{tpu_custom_call.1} parent=0 // pred_check_branch
    %111 = sbr.rel (0) target = $region21
  $region20: #{tpu_custom_call.1} parent=0 // pred_region
    _
  $region21: #{tpu_custom_call.1} parent=0 // pred_fallthru
    _

</llo_original>
